<compile_context>
chip_gen: v7x
topology: tpu7x:2x2x1
jax: 0.10.0
libtpu: 0.0.40
codegen_flags: <defaults>
</compile_context>

<pallas_src>
from functools import partial

import jax
import jax.numpy as jnp
from jax import lax
from jax.experimental import pallas as pl
from jax.experimental.pallas import tpu as pltpu


def critic_kernel(x_ref, w1_ref, b1_ref, w2_ref, b2_ref, w3_ref, b3_ref,
                  out_ref):
    # x_ref: (TB, in_dim) f32 — cast to bf16 on the VPU here rather than in a
    # separate wrapper-side HBM pass.
    x = x_ref[...].astype(jnp.bfloat16)

    # Layer 1: (TB, in_dim) @ (in_dim, 256), bf16 MXU inputs, f32 accumulate.
    h1 = jnp.dot(x, w1_ref[...], preferred_element_type=jnp.float32)
    h1 = jnp.maximum(h1 + b1_ref[...], 0.0)

    # Layer 2 (dominant FLOPs): (TB, 256) @ (256, 256).
    h2 = jnp.dot(h1.astype(jnp.bfloat16), w2_ref[...],
                 preferred_element_type=jnp.float32)
    h2 = jnp.maximum(h2 + b2_ref[...], 0.0)

    # Layer 3 (out_features = 1): contract h2's lane (feature) axis against
    # w3 with the batch landing on lanes -> lane-dense (1, TB) result tile.
    h3 = lax.dot_general(
        w3_ref[...], h2.astype(jnp.bfloat16),
        dimension_numbers=(((1,), (1,)), ((), ())),
        preferred_element_type=jnp.float32)            # (1, TB) f32

    # Fold the scalar bias b3 (SMEM) in-kernel; lane-dense store.
    out_ref[...] = h3 + b3_ref[0, 0]


def _round_up(n, m):
    return ((n + m - 1) // m) * m


def _pick_batch_tile(batch):
    """TB policy (see header): multiple of 128, >= 2 grid steps for mid-size
    batches (v7x megacore), 1024-row tiles at large batch."""
    if batch <= 128:
        return 128
    if batch <= 4096:
        return min(1024, _round_up(pl.cdiv(batch, 2), 128))
    return 1024


def prepare_params(params):
    """One-time conversion of weights/biases to kernel-ready dtypes/layouts
    (hoisted out of the per-call path per the perf review)."""
    w1, b1, w2, b2, w3, b3 = params
    return (
        jnp.asarray(w1, jnp.bfloat16),                  # (in_dim, 256)
        jnp.asarray(b1, jnp.float32).reshape(1, 256),   # (1, 256)
        jnp.asarray(w2, jnp.bfloat16),                  # (256, 256)
        jnp.asarray(b2, jnp.float32).reshape(1, 256),   # (1, 256)
        jnp.asarray(w3, jnp.bfloat16).reshape(1, 256),  # (1, 256) lane row
        jnp.asarray(b3, jnp.float32).reshape(1, 1),     # (1, 1) SMEM scalar
    )


@partial(jax.jit, static_argnums=(2,))
def critic_forward(x, prepared_params, state_dim):
    """x: any shape flattening to (-1, 4*state_dim). Returns (B, 1) f32."""
    w1b, b1f, w2b, b2f, w3b, b3f = prepared_params
    in_dim = 4 * state_dim
    x2d = x.reshape(-1, in_dim).astype(jnp.float32)
    batch = x2d.shape[0]

    TB = _pick_batch_tile(batch)
    b_pad = _round_up(batch, TB)
    if b_pad != batch:
        x2d = jnp.pad(x2d, ((0, b_pad - batch), (0, 0)))
    grid = (b_pad // TB,)

    out = pl.pallas_call(
        critic_kernel,
        out_shape=jax.ShapeDtypeStruct((1, b_pad), jnp.float32),
        grid=grid,
        in_specs=[
            pl.BlockSpec((TB, in_dim), lambda i: (i, 0)),   # x tiles stream in
            pl.BlockSpec((in_dim, 256), lambda i: (0, 0)),  # w1: VMEM-resident
            pl.BlockSpec((1, 256), lambda i: (0, 0)),       # b1
            pl.BlockSpec((256, 256), lambda i: (0, 0)),     # w2
            pl.BlockSpec((1, 256), lambda i: (0, 0)),       # b2
            pl.BlockSpec((1, 256), lambda i: (0, 0)),       # w3 as a lane row
            pl.BlockSpec(memory_space=pltpu.MemorySpace.SMEM),  # b3 scalar
        ],
        out_specs=pl.BlockSpec((1, TB), lambda i: (0, i)),  # lane-dense output
        compiler_params=pltpu.CompilerParams(
            dimension_semantics=("parallel",),  # megacore sharding on v7x
            vmem_limit_bytes=32 << 20,
        ),
    )(x2d, w1b, b1f, w2b, b2f, w3b, b3f)

    # (1, b_pad) lane-dense result -> (batch, 1), dropping padded rows.
    return out.reshape(b_pad, 1)[:batch]


def init_params(key, state_dim):
    """Deterministic synthetic init (Kaiming-uniform-ish like nn.Linear)."""
    in_dim = 4 * state_dim
    ks = jax.random.split(key, 6)

    def unif(k, shape, fan_in):
        bound = 1.0 / jnp.sqrt(fan_in)
        return jax.random.uniform(k, shape, jnp.float32, -bound, bound)

    w1 = unif(ks[0], (in_dim, 256), in_dim)
    b1 = unif(ks[1], (1, 256), in_dim)
    w2 = unif(ks[2], (256, 256), 256)
    b2 = unif(ks[3], (1, 256), 256)
    w3 = unif(ks[4], (256, 1), 256)
    b3 = unif(ks[5], (1, 1), 256)
    return (w1, b1, w2, b2, w3, b3)


if __name__ == "__main__":
    key = jax.random.PRNGKey(0)
    k_param, k_x = jax.random.split(key)

    state_dim = 8
    batch = 2
    # Input shaped (batch, 4, state_dim) — forward flattens to (batch, 4*state_dim).
    x = jax.random.normal(k_x, (batch, 4, state_dim), jnp.float32)

    params = init_params(k_param, state_dim)
    prepared = prepare_params(params)   # one-time, kernel-ready layouts

    out = critic_forward(x, prepared, state_dim)
    out = jax.block_until_ready(out)

    # Pure-JAX f32 reference (kernel uses bf16 MXU inputs with f32 accumulation,
    # so tolerance is loosened accordingly).
    w1, b1, w2, b2, w3, b3 = params
    xr = x.reshape(-1, 4 * state_dim)
    ref = jnp.maximum(xr @ w1 + b1, 0.0)
    ref = jnp.maximum(ref @ w2 + b2, 0.0)
    ref = ref @ w3 + b3

    assert out.shape == (batch, 1)
    assert jnp.allclose(out, ref, atol=5e-2, rtol=5e-2), (out, ref)

    print("KERNEL_OK")
</pallas_src>

<mosaic_0001>
module attributes {stable_mosaic.version = 11 : i64} {
  func.func @critic_kernel(%arg0: i32, %arg1: memref<128x32xf32, #tpu.memory_space<vmem>>, %arg2: memref<32x256xbf16, #tpu.memory_space<vmem>>, %arg3: memref<1x256xf32, #tpu.memory_space<vmem>>, %arg4: memref<256x256xbf16, #tpu.memory_space<vmem>>, %arg5: memref<1x256xf32, #tpu.memory_space<vmem>>, %arg6: memref<1x256xbf16, #tpu.memory_space<vmem>>, %arg7: memref<1x1xf32, #tpu.memory_space<smem>>, %arg8: memref<1x128xf32, #tpu.memory_space<vmem>>) attributes {dimension_semantics = [#tpu.dimension_semantics<parallel>], iteration_bounds = array<i64: 1>, scalar_prefetch = 0 : i64, scratch_operands = 0 : i64, tpu.core_type = #tpu.core_type<tc>, window_params = [{transform_indices = @transform_0, window_bounds = array<i64: 128, 32>}, {pipeline_mode = #tpu.pipeline_mode<synchronous>, transform_indices = @transform_1, window_bounds = array<i64: 32, 256>}, {pipeline_mode = #tpu.pipeline_mode<synchronous>, transform_indices = @transform_2, window_bounds = array<i64: 1, 256>}, {pipeline_mode = #tpu.pipeline_mode<synchronous>, transform_indices = @transform_3, window_bounds = array<i64: 256, 256>}, {pipeline_mode = #tpu.pipeline_mode<synchronous>, transform_indices = @transform_4, window_bounds = array<i64: 1, 256>}, {pipeline_mode = #tpu.pipeline_mode<synchronous>, transform_indices = @transform_5, window_bounds = array<i64: 1, 256>}, {transform_indices = @transform_6, window_bounds = array<i64: 1, 1>}, {transform_indices = @transform_7, window_bounds = array<i64: 1, 128>}]} {
    %c0 = arith.constant 0 : index
    %c0_0 = arith.constant 0 : index
    %0 = vector.load %arg1[%c0, %c0_0] : memref<128x32xf32, #tpu.memory_space<vmem>>, vector<128x32xf32>
    %1 = arith.truncf %0 : vector<128x32xf32> to vector<128x32xbf16>
    %c0_1 = arith.constant 0 : index
    %c0_2 = arith.constant 0 : index
    %2 = vector.load %arg2[%c0_1, %c0_2] : memref<32x256xbf16, #tpu.memory_space<vmem>>, vector<32x256xbf16>
    %cst = arith.constant dense<0.000000e+00> : vector<128x256xf32>
    %3 = tpu.matmul %1, %2, %cst {dimension_numbers = #tpu.dot_dimension_numbers<[1], [0], [0], [1], [0, 0, 1, 1], [], []>} : vector<128x32xbf16>, vector<32x256xbf16>, vector<128x256xf32> -> vector<128x256xf32>
    %c0_3 = arith.constant 0 : index
    %c0_4 = arith.constant 0 : index
    %4 = vector.load %arg3[%c0_3, %c0_4] : memref<1x256xf32, #tpu.memory_space<vmem>>, vector<1x256xf32>
    %5 = vector.broadcast %4 : vector<1x256xf32> to vector<128x256xf32>
    %6 = arith.addf %3, %5 : vector<128x256xf32>
    %cst_5 = arith.constant 0.000000e+00 : f32
    %7 = vector.broadcast %cst_5 : f32 to vector<128x256xf32>
    %8 = arith.maximumf %6, %7 : vector<128x256xf32>
    %9 = arith.truncf %8 : vector<128x256xf32> to vector<128x256xbf16>
    %c0_6 = arith.constant 0 : index
    %c0_7 = arith.constant 0 : index
    %10 = vector.load %arg4[%c0_6, %c0_7] : memref<256x256xbf16, #tpu.memory_space<vmem>>, vector<256x256xbf16>
    %cst_8 = arith.constant dense<0.000000e+00> : vector<128x256xf32>
    %11 = tpu.matmul %9, %10, %cst_8 {dimension_numbers = #tpu.dot_dimension_numbers<[1], [0], [0], [1], [0, 0, 1, 1], [], []>} : vector<128x256xbf16>, vector<256x256xbf16>, vector<128x256xf32> -> vector<128x256xf32>
    %c0_9 = arith.constant 0 : index
    %c0_10 = arith.constant 0 : index
    %12 = vector.load %arg5[%c0_9, %c0_10] : memref<1x256xf32, #tpu.memory_space<vmem>>, vector<1x256xf32>
    %13 = vector.broadcast %12 : vector<1x256xf32> to vector<128x256xf32>
    %14 = arith.addf %11, %13 : vector<128x256xf32>
    %cst_11 = arith.constant 0.000000e+00 : f32
    %15 = vector.broadcast %cst_11 : f32 to vector<128x256xf32>
    %16 = arith.maximumf %14, %15 : vector<128x256xf32>
    %c0_12 = arith.constant 0 : index
    %c0_13 = arith.constant 0 : index
    %17 = vector.load %arg6[%c0_12, %c0_13] : memref<1x256xbf16, #tpu.memory_space<vmem>>, vector<1x256xbf16>
    %18 = arith.truncf %16 : vector<128x256xf32> to vector<128x256xbf16>
    %cst_14 = arith.constant dense<0.000000e+00> : vector<1x128xf32>
    %19 = tpu.matmul %17, %18, %cst_14 {dimension_numbers = #tpu.dot_dimension_numbers<[1], [1], [0], [0], [0, 0, 1, 0], [], []>} : vector<1x256xbf16>, vector<128x256xbf16>, vector<1x128xf32> -> vector<1x128xf32>
    %c0_15 = arith.constant 0 : index
    %c0_16 = arith.constant 0 : index
    %20 = memref.load %arg7[%c0_15, %c0_16] : memref<1x1xf32, #tpu.memory_space<smem>>
    %21 = vector.broadcast %20 : f32 to vector<1x128xf32>
    %22 = arith.addf %19, %21 : vector<1x128xf32>
    %c0_17 = arith.constant 0 : index
    %c0_18 = arith.constant 0 : index
    %23 = vector.load %arg8[%c0_17, %c0_18] : memref<1x128xf32, #tpu.memory_space<vmem>>, vector<1x128xf32>
    tpu.vector_store %arg8[%c0_17, %c0_18], %22 {strides = array<i32>} : memref<1x128xf32, #tpu.memory_space<vmem>>, vector<1x128xf32>,
    return
  }
  func.func @transform_0(%arg0: i32) -> (i32, i32) {
    %c0_i32 = arith.constant 0 : i32
    %c0_i32_0 = arith.constant 0 : i32
    return %arg0, %c0_i32 : i32, i32
  }
  func.func @transform_1(%arg0: i32) -> (i32, i32) {
    %c0_i32 = arith.constant 0 : i32
    %c0_i32_0 = arith.constant 0 : i32
    %c0_i32_1 = arith.constant 0 : i32
    return %c0_i32, %c0_i32_0 : i32, i32
  }
  func.func @transform_2(%arg0: i32) -> (i32, i32) {
    %c0_i32 = arith.constant 0 : i32
    %c0_i32_0 = arith.constant 0 : i32
    %c0_i32_1 = arith.constant 0 : i32
    return %c0_i32, %c0_i32_0 : i32, i32
  }
  func.func @transform_3(%arg0: i32) -> (i32, i32) {
    %c0_i32 = arith.constant 0 : i32
    %c0_i32_0 = arith.constant 0 : i32
    %c0_i32_1 = arith.constant 0 : i32
    return %c0_i32, %c0_i32_0 : i32, i32
  }
  func.func @transform_4(%arg0: i32) -> (i32, i32) {
    %c0_i32 = arith.constant 0 : i32
    %c0_i32_0 = arith.constant 0 : i32
    %c0_i32_1 = arith.constant 0 : i32
    return %c0_i32, %c0_i32_0 : i32, i32
  }
  func.func @transform_5(%arg0: i32) -> (i32, i32) {
    %c0_i32 = arith.constant 0 : i32
    %c0_i32_0 = arith.constant 0 : i32
    %c0_i32_1 = arith.constant 0 : i32
    return %c0_i32, %c0_i32_0 : i32, i32
  }
  func.func @transform_6(%arg0: i32) -> (i32, i32) {
    %c0_i32 = arith.constant 0 : i32
    %c0_i32_0 = arith.constant 0 : i32
    %c0_i32_1 = arith.constant 0 : i32
    return %c0_i32, %c0_i32_0 : i32, i32
  }
  func.func @transform_7(%arg0: i32) -> (i32, i32) {
    %c0_i32 = arith.constant 0 : i32
    %c0_i32_0 = arith.constant 0 : i32
    return %c0_i32, %arg0 : i32, i32
  }
}

</mosaic_0001>

<llo_original>
// kernel: critic_forward.1
$region0: #{critic_forward.1}
  #allocation0 [shape = 'u32[]', space=smem, size = 0x4, offset = 0x4, fixed_abs, tag = 'smem constant byte address 0x4 - core index']
  #allocation1 [shape = 'u32[144,128]{1,0:T(1,128)}', space=vmem, size = 0x12000, scoped, tag = 'internal scratch']
  #allocation2 [shape = 'f32[1,1]{1,0:T(1,128)S(6)}', space=smem, size = 0x200, scoped, tag = 'scoped memory for critic_forward.1']
  %s0 = inlined_call_operand.vmem [shape: f32[128,32], index: 0, kind: input, shape index: {}]
  %s1 = inlined_call_operand.vmem [shape: bf16[32,256], index: 1, kind: input, shape index: {}]
  %s2 = inlined_call_operand.vmem [shape: f32[1,256], index: 2, kind: input, shape index: {}]
  %s3 = inlined_call_operand.hbm [shape: bf16[256,256], index: 3, kind: input, shape index: {}]
  %s4 = inlined_call_operand.vmem [shape: f32[1,256], index: 4, kind: input, shape index: {}]
  %s5 = inlined_call_operand.vmem [shape: bf16[1,256], index: 5, kind: input, shape index: {}]
  %s6 = inlined_call_operand.<no memory space> [shape: f32[1,1], index: 6, kind: input, shape index: {}]
  %s7 = inlined_call_operand.vmem [shape: f32[1,128], index: 7, kind: output, shape index: {}]
  %s8 = sld [smem:[#allocation0]]
  $region42: #{critic_forward.1} parent=0
    _
  %s10 = ssub.s32 1, %s8
  %s11 = scalar_select 0, %s10, %s8
  %12 = sst [smem:[#allocation2]] %s6
  $region1: #{critic_forward.1} parent=0
    #allocation3 [shape = 'u8[131072]{0}', space=vmem, size = 0x20000, scoped, tag = 'input window, operand 3, single buffered']
    #allocation4 [shape = 's32[1]{0}', space=sflag, size = 0x4, scoped, tag = 'scoped memory for critic_forward.1']
    %13 = vsyncpa [#allocation4], 0
    // Predicated region
    $region2: #{critic_forward.1} parent=1 // pred_check
      _
    $region3: #{critic_forward.1} parent=1 // pred_check_branch
      %15 = sbr.rel (0) target = $region5
    $region4: #{critic_forward.1} parent=1 // pred_region
      _
    $region5: #{critic_forward.1} parent=1 // pred_fallthru
      _
    // Predicated region
    $region6: #{critic_forward.1} parent=1 // pred_check
      _
    $region7: #{critic_forward.1} parent=1 // pred_check_branch
      %17 = sbr.rel (0) target = $region9
    $region8: #{critic_forward.1} parent=1 // pred_region
      _
    $region9: #{critic_forward.1} parent=1 // pred_fallthru
      _
    // Predicated region
    $region10: #{critic_forward.1} parent=1 // pred_check
      _
    $region11: #{critic_forward.1} parent=1 // pred_check_branch
      %19 = sbr.rel (0) target = $region13
    $region12: #{critic_forward.1} parent=1 // pred_region
      _
    $region13: #{critic_forward.1} parent=1 // pred_fallthru
      _
    // Predicated region
    $region14: #{critic_forward.1} parent=1 // pred_check
      _
    $region15: #{critic_forward.1} parent=1 // pred_check_branch
      %21 = sbr.rel (0) target = $region17
    $region16: #{critic_forward.1} parent=1 // pred_region
      %s23 = ssub.s32 4096, 4096
      %24 = vsyncadd [#allocation4], %s23
      %s25 = sshll.u32 [#allocation3], 4
      %s26 = int_to_ptr.vmem [resolvable:$true] %s25
      %31 = dma.hbm_to_vmem [thread:$0]  %s3, 4096, %s26, [#allocation4], 128, 128, 8
    $region17: #{critic_forward.1} parent=1 // pred_fallthru
      _
    // Predicated region
    $region18: #{critic_forward.1} parent=1 // pred_check
      _
    $region19: #{critic_forward.1} parent=1 // pred_check_branch
      %33 = sbr.rel (0) target = $region21
    $region20: #{critic_forward.1} parent=1 // pred_region
      _
    $region21: #{critic_forward.1} parent=1 // pred_fallthru
      _
    // Predicated region
    $region22: #{critic_forward.1} parent=1 // pred_check
      _
    $region23: #{critic_forward.1} parent=1 // pred_check_branch
      %35 = sbr.rel (0) target = $region25
    $region24: #{critic_forward.1} parent=1 // pred_region
      _
    $region25: #{critic_forward.1} parent=1 // pred_fallthru
      _
    // Predicated region
    $region26: #{critic_forward.1} parent=1 // pred_check
      _
    $region27: #{critic_forward.1} parent=1 // pred_check_branch
      %37 = sbr.rel (0) target = $region29
    $region28: #{critic_forward.1} parent=1 // pred_region
      _
    $region29: #{critic_forward.1} parent=1 // pred_fallthru
      _
    // Predicated region
    $region30: #{critic_forward.1} parent=1 // pred_check
      _
    $region31: #{critic_forward.1} parent=1 // pred_check_branch
      %39 = sbr.rel (0) target = $region33
    $region32: #{critic_forward.1} parent=1 // pred_region
      %40 = dma.done [#allocation4], 4096
    $region33: #{critic_forward.1} parent=1 // pred_fallthru
      _
    %v42 = vld [vmem:[%s0] sm:$0xff]
    %v43 = vld [vmem:[%s0 + $0x8] sm:$0xff]
    %v44 = vld [vmem:[%s0 + $0x10] sm:$0xff]
    %v45 = vld [vmem:[%s0 + $0x18] sm:$0xff]
    %v46 = vld [vmem:[%s0 + $0x20] sm:$0xff]
    %v47 = vld [vmem:[%s0 + $0x28] sm:$0xff]
    %v48 = vld [vmem:[%s0 + $0x30] sm:$0xff]
    %v49 = vld [vmem:[%s0 + $0x38] sm:$0xff]
    %v50 = vld [vmem:[%s0 + $0x40] sm:$0xff]
    %v51 = vld [vmem:[%s0 + $0x48] sm:$0xff]
    %v52 = vld [vmem:[%s0 + $0x50] sm:$0xff]
    %v53 = vld [vmem:[%s0 + $0x58] sm:$0xff]
    %v54 = vld [vmem:[%s0 + $0x60] sm:$0xff]
    %v55 = vld [vmem:[%s0 + $0x68] sm:$0xff]
    %v56 = vld [vmem:[%s0 + $0x70] sm:$0xff]
    %v57 = vld [vmem:[%s0 + $0x78] sm:$0xff]
    %v58 = vpack.c.bf16 %v43, %v42
    %v59 = vpack.c.bf16 %v45, %v44
    %v60 = vpack.c.bf16 %v47, %v46
    %v61 = vpack.c.bf16 %v49, %v48
    %v62 = vpack.c.bf16 %v51, %v50
    %v63 = vpack.c.bf16 %v53, %v52
    %v64 = vpack.c.bf16 %v55, %v54
    %v65 = vpack.c.bf16 %v57, %v56
    %v66 = vld [vmem:[%s1] sm:$0xff]
    %v67 = vld [vmem:[%s1 + $0x8] sm:$0xff]
    %v68 = vld [vmem:[%s1 + $0x10] sm:$0xff]
    %v69 = vld [vmem:[%s1 + $0x18] sm:$0xff]
    %v70 = vld [vmem:[%s2] sm:$0x3]
    %v72 = vlaneseq
    %v73 = vshrl.u32 %v72, 7
    %v74 = vsub.s32 0, %v73
    %v75 = vrot.slane %v70, %v74
    %v76 = vlaneseq
    %v77 = vshrl.u32 %v76, 7
    %v78 = vsub.s32 1, %v77
    %v79 = vrot.slane %v70, %v78
    %v86 = vunpack.c.l.b16 %v66
    %v87 = vunpack.c.h.b16 %v66
    %v88 = vunpack.c.l.b16 %v67
    %v89 = vunpack.c.h.b16 %v67
    %v90 = vunpack.c.l.b16 %v68
    %v91 = vunpack.c.h.b16 %v68
    %v92 = vunpack.c.l.b16 %v69
    %v93 = vunpack.c.h.b16 %v69
    %v94 = vpack.c.b16 %v88, %v86
    %v95 = vpack.c.b16 %v89, %v87
    %v96 = vpack.c.b16 %v92, %v90
    %v97 = vpack.c.b16 %v93, %v91
    %vm102 = vcmask 261120
    %v104 = vsel %vm102, %v58, 0
    %v107 = vsel %vm102, %v59, 0
    %v110 = vsel %vm102, %v60, 0
    %v113 = vsel %vm102, %v61, 0
    %v116 = vsel %vm102, %v62, 0
    %v119 = vsel %vm102, %v63, 0
    %v122 = vsel %vm102, %v64, 0
    %v125 = vsel %vm102, %v65, 0
    %127 = vmatprep.subr.bf16.mxu0 %v95
    %128 = vmatpush1.bf16.msra.mxu0 %v94
    %129 = vmatprep.subr.bf16.mxu0 %v97
    %130 = vmatpush1.bf16.msra.mxu0 %v96
    %131 = vmatprep.subr.bf16.mxu0 0
    %132 = vmatpush1.bf16.msra.mxu0 0
    %133 = vmatprep.subr.bf16.mxu0 0
    %134 = vmatpush1.bf16.msra.mxu0 0
    %135 = vmatprep.subr.bf16.mxu0 0
    %136 = vmatpush1.bf16.msra.mxu0 0
    %137 = vmatprep.subr.bf16.mxu0 0
    %138 = vmatpush1.bf16.msra.mxu0 0
    %139 = vmatprep.subr.bf16.mxu0 0
    %140 = vmatpush1.bf16.msra.mxu0 0
    %141 = vmatprep.subr.bf16.mxu0 0
    %142 = vmatpush1.bf16.msra.mxu0 0
    %143 = vmatprep.subr.bf16.mxu0 0
    %144 = vmatpush1.bf16.msra.mxu0 0
    %145 = vmatprep.subr.bf16.mxu0 0
    %146 = vmatpush1.bf16.msra.mxu0 0
    %147 = vmatprep.subr.bf16.mxu0 0
    %148 = vmatpush1.bf16.msra.mxu0 0
    %149 = vmatprep.subr.bf16.mxu0 0
    %150 = vmatpush1.bf16.msra.mxu0 0
    %151 = vmatprep.subr.bf16.mxu0 0
    %152 = vmatpush1.bf16.msra.mxu0 0
    %153 = vmatprep.subr.bf16.mxu0 0
    %154 = vmatpush1.bf16.msra.mxu0 0
    %155 = vmatprep.subr.bf16.mxu0 0
    %156 = vmatpush1.bf16.msra.mxu0 0
    %157 = vmatprep.subr.bf16.mxu0 0
    %158 = vmatpush1.bf16.msra.mxu0 0
    %159 = vmatprep.mubr.bf16.mxu0 0
    %160 = vmatmul.mubr.bf16.gmra.mrb[0].mxu0 %v104
    %v161 = vpop.f32.mrb[0].mxu0
    %v162 = vadd.f32 %v75, %v161
    %v163 = vpop.f32.mrb[0].mxu0
    %v164 = vadd.f32 %v79, %v163
    %v165 = vpop.f32.mrb[0].mxu0
    %v166 = vadd.f32 %v75, %v165
    %v167 = vpop.f32.mrb[0].mxu0
    %v168 = vadd.f32 %v79, %v167
    %169 = vmatprep.mubr.bf16.mxu0 0
    %170 = vmatmul.mubr.bf16.gmra.mrb[0].mxu0 %v107
    %v171 = vpop.f32.mrb[0].mxu0
    %v172 = vadd.f32 %v75, %v171
    %v173 = vpop.f32.mrb[0].mxu0
    %v174 = vadd.f32 %v79, %v173
    %v175 = vpop.f32.mrb[0].mxu0
    %v176 = vadd.f32 %v75, %v175
    %v177 = vpop.f32.mrb[0].mxu0
    %v178 = vadd.f32 %v79, %v177
    %179 = vmatprep.mubr.bf16.mxu0 0
    %180 = vmatmul.mubr.bf16.gmra.mrb[0].mxu0 %v110
    %v181 = vpop.f32.mrb[0].mxu0
    %v182 = vadd.f32 %v75, %v181
    %v183 = vpop.f32.mrb[0].mxu0
    %v184 = vadd.f32 %v79, %v183
    %v185 = vpop.f32.mrb[0].mxu0
    %v186 = vadd.f32 %v75, %v185
    %v187 = vpop.f32.mrb[0].mxu0
    %v188 = vadd.f32 %v79, %v187
    %189 = vmatprep.mubr.bf16.mxu0 0
    %190 = vmatmul.mubr.bf16.gmra.mrb[0].mxu0 %v113
    %v191 = vpop.f32.mrb[0].mxu0
    %v192 = vadd.f32 %v75, %v191
    %v193 = vpop.f32.mrb[0].mxu0
    %v194 = vadd.f32 %v79, %v193
    %v195 = vpop.f32.mrb[0].mxu0
    %v196 = vadd.f32 %v75, %v195
    %v197 = vpop.f32.mrb[0].mxu0
    %v198 = vadd.f32 %v79, %v197
    %199 = vmatprep.mubr.bf16.mxu0 0
    %200 = vmatmul.mubr.bf16.gmra.mrb[0].mxu0 %v116
    %v201 = vpop.f32.mrb[0].mxu0
    %v202 = vadd.f32 %v75, %v201
    %v203 = vpop.f32.mrb[0].mxu0
    %v204 = vadd.f32 %v79, %v203
    %v205 = vpop.f32.mrb[0].mxu0
    %v206 = vadd.f32 %v75, %v205
    %v207 = vpop.f32.mrb[0].mxu0
    %v208 = vadd.f32 %v79, %v207
    %209 = vmatprep.mubr.bf16.mxu0 0
    %210 = vmatmul.mubr.bf16.gmra.mrb[0].mxu0 %v119
    %v211 = vpop.f32.mrb[0].mxu0
    %v212 = vadd.f32 %v75, %v211
    %v213 = vpop.f32.mrb[0].mxu0
    %v214 = vadd.f32 %v79, %v213
    %v215 = vpop.f32.mrb[0].mxu0
    %v216 = vadd.f32 %v75, %v215
    %v217 = vpop.f32.mrb[0].mxu0
    %v218 = vadd.f32 %v79, %v217
    %219 = vmatprep.mubr.bf16.mxu0 0
    %220 = vmatmul.mubr.bf16.gmra.mrb[0].mxu0 %v122
    %v221 = vpop.f32.mrb[0].mxu0
    %v222 = vadd.f32 %v75, %v221
    %v223 = vpop.f32.mrb[0].mxu0
    %v224 = vadd.f32 %v79, %v223
    %v225 = vpop.f32.mrb[0].mxu0
    %v226 = vadd.f32 %v75, %v225
    %v227 = vpop.f32.mrb[0].mxu0
    %v228 = vadd.f32 %v79, %v227
    %229 = vmatprep.mubr.bf16.mxu0 0
    %230 = vmatmul.mubr.bf16.gmra.mrb[0].mxu0 %v125
    %v231 = vpop.f32.mrb[0].mxu0
    %v232 = vadd.f32 %v75, %v231
    %v233 = vpop.f32.mrb[0].mxu0
    %v234 = vadd.f32 %v79, %v233
    %v235 = vpop.f32.mrb[0].mxu0
    %v236 = vadd.f32 %v75, %v235
    %v237 = vpop.f32.mrb[0].mxu0
    %v238 = vadd.f32 %v79, %v237
    %239 = vdwg.mxu0
    %v240 = vmax.f32 %v162, 0.0
    %v241 = vmax.f32 %v164, 0.0
    %v242 = vmax.f32 %v166, 0.0
    %v243 = vmax.f32 %v168, 0.0
    %v244 = vmax.f32 %v172, 0.0
    %v245 = vmax.f32 %v174, 0.0
    %v246 = vmax.f32 %v176, 0.0
    %v247 = vmax.f32 %v178, 0.0
    %v248 = vmax.f32 %v182, 0.0
    %v249 = vmax.f32 %v184, 0.0
    %v250 = vmax.f32 %v186, 0.0
    %v251 = vmax.f32 %v188, 0.0
    %v252 = vmax.f32 %v192, 0.0
    %v253 = vmax.f32 %v194, 0.0
    %v254 = vmax.f32 %v196, 0.0
    %v255 = vmax.f32 %v198, 0.0
    %v256 = vmax.f32 %v202, 0.0
    %v257 = vmax.f32 %v204, 0.0
    %v258 = vmax.f32 %v206, 0.0
    %v259 = vmax.f32 %v208, 0.0
    %v260 = vmax.f32 %v212, 0.0
    %v261 = vmax.f32 %v214, 0.0
    %v262 = vmax.f32 %v216, 0.0
    %v263 = vmax.f32 %v218, 0.0
    %v264 = vmax.f32 %v222, 0.0
    %v265 = vmax.f32 %v224, 0.0
    %v266 = vmax.f32 %v226, 0.0
    %v267 = vmax.f32 %v228, 0.0
    %v268 = vmax.f32 %v232, 0.0
    %v269 = vmax.f32 %v234, 0.0
    %v270 = vmax.f32 %v236, 0.0
    %v271 = vmax.f32 %v238, 0.0
    %v272 = vpack.c.bf16 %v242, %v240
    %v273 = vpack.c.bf16 %v243, %v241
    %v274 = vpack.c.bf16 %v246, %v244
    %v275 = vpack.c.bf16 %v247, %v245
    %v276 = vpack.c.bf16 %v250, %v248
    %v277 = vpack.c.bf16 %v251, %v249
    %v278 = vpack.c.bf16 %v254, %v252
    %v279 = vpack.c.bf16 %v255, %v253
    %v280 = vpack.c.bf16 %v258, %v256
    %v281 = vpack.c.bf16 %v259, %v257
    %v282 = vpack.c.bf16 %v262, %v260
    %v283 = vpack.c.bf16 %v263, %v261
    %v284 = vpack.c.bf16 %v266, %v264
    %v285 = vpack.c.bf16 %v267, %v265
    %v286 = vpack.c.bf16 %v270, %v268
    %v287 = vpack.c.bf16 %v271, %v269
    %v288 = vld [vmem:[#allocation3] sm:$0xff]
    %v289 = vld [vmem:[#allocation3 + $0x8] sm:$0xff]
    %v290 = vld [vmem:[#allocation3 + $0x10] sm:$0xff]
    %v291 = vld [vmem:[#allocation3 + $0x18] sm:$0xff]
    %v292 = vld [vmem:[#allocation3 + $0x20] sm:$0xff]
    %v293 = vld [vmem:[#allocation3 + $0x28] sm:$0xff]
    %v294 = vld [vmem:[#allocation3 + $0x30] sm:$0xff]
    %v295 = vld [vmem:[#allocation3 + $0x38] sm:$0xff]
    %v296 = vld [vmem:[#allocation3 + $0x40] sm:$0xff]
    %v297 = vld [vmem:[#allocation3 + $0x48] sm:$0xff]
    %v298 = vld [vmem:[#allocation3 + $0x50] sm:$0xff]
    %v299 = vld [vmem:[#allocation3 + $0x58] sm:$0xff]
    %v300 = vld [vmem:[#allocation3 + $0x60] sm:$0xff]
    %v301 = vld [vmem:[#allocation3 + $0x68] sm:$0xff]
    %v302 = vld [vmem:[#allocation3 + $0x70] sm:$0xff]
    %v303 = vld [vmem:[#allocation3 + $0x78] sm:$0xff]
    %v304 = vld [vmem:[#allocation3 + $0x80] sm:$0xff]
    %v305 = vld [vmem:[#allocation3 + $0x88] sm:$0xff]
    %v306 = vld [vmem:[#allocation3 + $0x90] sm:$0xff]
    %v307 = vld [vmem:[#allocation3 + $0x98] sm:$0xff]
    %v308 = vld [vmem:[#allocation3 + $0xa0] sm:$0xff]
    %v309 = vld [vmem:[#allocation3 + $0xa8] sm:$0xff]
    %v310 = vld [vmem:[#allocation3 + $0xb0] sm:$0xff]
    %v311 = vld [vmem:[#allocation3 + $0xb8] sm:$0xff]
    %v312 = vld [vmem:[#allocation3 + $0xc0] sm:$0xff]
    %v313 = vld [vmem:[#allocation3 + $0xc8] sm:$0xff]
    %v314 = vld [vmem:[#allocation3 + $0xd0] sm:$0xff]
    %v315 = vld [vmem:[#allocation3 + $0xd8] sm:$0xff]
    %v316 = vld [vmem:[#allocation3 + $0xe0] sm:$0xff]
    %v317 = vld [vmem:[#allocation3 + $0xe8] sm:$0xff]
    %v318 = vld [vmem:[#allocation3 + $0xf0] sm:$0xff]
    %v319 = vld [vmem:[#allocation3 + $0xf8] sm:$0xff]
    %v320 = vld [vmem:[%s4] sm:$0x3]
    %v322 = vlaneseq
    %v323 = vshrl.u32 %v322, 7
    %v324 = vsub.s32 0, %v323
    %v325 = vrot.slane %v320, %v324
    %v326 = vlaneseq
    %v327 = vshrl.u32 %v326, 7
    %v328 = vsub.s32 1, %v327
    %v329 = vrot.slane %v320, %v328
    %v364 = vunpack.c.l.b16 %v288
    %v365 = vunpack.c.h.b16 %v288
    %v366 = vunpack.c.l.b16 %v289
    %v367 = vunpack.c.h.b16 %v289
    %v368 = vunpack.c.l.b16 %v290
    %v369 = vunpack.c.h.b16 %v290
    %v370 = vunpack.c.l.b16 %v291
    %v371 = vunpack.c.h.b16 %v291
    %v372 = vunpack.c.l.b16 %v292
    %v373 = vunpack.c.h.b16 %v292
    %v374 = vunpack.c.l.b16 %v293
    %v375 = vunpack.c.h.b16 %v293
    %v376 = vunpack.c.l.b16 %v294
    %v377 = vunpack.c.h.b16 %v294
    %v378 = vunpack.c.l.b16 %v295
    %v379 = vunpack.c.h.b16 %v295
    %v380 = vunpack.c.l.b16 %v296
    %v381 = vunpack.c.h.b16 %v296
    %v382 = vunpack.c.l.b16 %v297
    %v383 = vunpack.c.h.b16 %v297
    %v384 = vunpack.c.l.b16 %v298
    %v385 = vunpack.c.h.b16 %v298
    %v386 = vunpack.c.l.b16 %v299
    %v387 = vunpack.c.h.b16 %v299
    %v388 = vunpack.c.l.b16 %v300
    %v389 = vunpack.c.h.b16 %v300
    %v390 = vunpack.c.l.b16 %v301
    %v391 = vunpack.c.h.b16 %v301
    %v392 = vunpack.c.l.b16 %v302
    %v393 = vunpack.c.h.b16 %v302
    %v394 = vunpack.c.l.b16 %v303
    %v395 = vunpack.c.h.b16 %v303
    %v396 = vunpack.c.l.b16 %v304
    %v397 = vunpack.c.h.b16 %v304
    %v398 = vunpack.c.l.b16 %v305
    %v399 = vunpack.c.h.b16 %v305
    %v400 = vunpack.c.l.b16 %v306
    %v401 = vunpack.c.h.b16 %v306
    %v402 = vunpack.c.l.b16 %v307
    %v403 = vunpack.c.h.b16 %v307
    %v404 = vunpack.c.l.b16 %v308
    %v405 = vunpack.c.h.b16 %v308
    %v406 = vunpack.c.l.b16 %v309
    %v407 = vunpack.c.h.b16 %v309
    %v408 = vunpack.c.l.b16 %v310
    %v409 = vunpack.c.h.b16 %v310
    %v410 = vunpack.c.l.b16 %v311
    %v411 = vunpack.c.h.b16 %v311
    %v412 = vunpack.c.l.b16 %v312
    %v413 = vunpack.c.h.b16 %v312
    %v414 = vunpack.c.l.b16 %v313
    %v415 = vunpack.c.h.b16 %v313
    %v416 = vunpack.c.l.b16 %v314
    %v417 = vunpack.c.h.b16 %v314
    %v418 = vunpack.c.l.b16 %v315
    %v419 = vunpack.c.h.b16 %v315
    %v420 = vunpack.c.l.b16 %v316
    %v421 = vunpack.c.h.b16 %v316
    %v422 = vunpack.c.l.b16 %v317
    %v423 = vunpack.c.h.b16 %v317
    %v424 = vunpack.c.l.b16 %v318
    %v425 = vunpack.c.h.b16 %v318
    %v426 = vunpack.c.l.b16 %v319
    %v427 = vunpack.c.h.b16 %v319
    %v428 = vpack.c.b16 %v366, %v364
    %v429 = vpack.c.b16 %v367, %v365
    %v430 = vpack.c.b16 %v370, %v368
    %v431 = vpack.c.b16 %v371, %v369
    %v432 = vpack.c.b16 %v374, %v372
    %v433 = vpack.c.b16 %v375, %v373
    %v434 = vpack.c.b16 %v378, %v376
    %v435 = vpack.c.b16 %v379, %v377
    %v436 = vpack.c.b16 %v382, %v380
    %v437 = vpack.c.b16 %v383, %v381
    %v438 = vpack.c.b16 %v386, %v384
    %v439 = vpack.c.b16 %v387, %v385
    %v440 = vpack.c.b16 %v390, %v388
    %v441 = vpack.c.b16 %v391, %v389
    %v442 = vpack.c.b16 %v394, %v392
    %v443 = vpack.c.b16 %v395, %v393
    %v444 = vpack.c.b16 %v398, %v396
    %v445 = vpack.c.b16 %v399, %v397
    %v446 = vpack.c.b16 %v402, %v400
    %v447 = vpack.c.b16 %v403, %v401
    %v448 = vpack.c.b16 %v406, %v404
    %v449 = vpack.c.b16 %v407, %v405
    %v450 = vpack.c.b16 %v410, %v408
    %v451 = vpack.c.b16 %v411, %v409
    %v452 = vpack.c.b16 %v414, %v412
    %v453 = vpack.c.b16 %v415, %v413
    %v454 = vpack.c.b16 %v418, %v416
    %v455 = vpack.c.b16 %v419, %v417
    %v456 = vpack.c.b16 %v422, %v420
    %v457 = vpack.c.b16 %v423, %v421
    %v458 = vpack.c.b16 %v426, %v424
    %v459 = vpack.c.b16 %v427, %v425
    %492 = vmatprep.subr.bf16.mxu0 %v429
    %493 = vmatpush1.bf16.msra.mxu0 %v428
    %494 = vmatprep.subr.bf16.mxu0 %v431
    %495 = vmatpush1.bf16.msra.mxu0 %v430
    %496 = vmatprep.subr.bf16.mxu0 %v433
    %497 = vmatpush1.bf16.msra.mxu0 %v432
    %498 = vmatprep.subr.bf16.mxu0 %v435
    %499 = vmatpush1.bf16.msra.mxu0 %v434
    %500 = vmatprep.subr.bf16.mxu0 %v437
    %501 = vmatpush1.bf16.msra.mxu0 %v436
    %502 = vmatprep.subr.bf16.mxu0 %v439
    %503 = vmatpush1.bf16.msra.mxu0 %v438
    %504 = vmatprep.subr.bf16.mxu0 %v441
    %505 = vmatpush1.bf16.msra.mxu0 %v440
    %506 = vmatprep.subr.bf16.mxu0 %v443
    %507 = vmatpush1.bf16.msra.mxu0 %v442
    %508 = vmatprep.subr.bf16.mxu0 %v445
    %509 = vmatpush1.bf16.msra.mxu0 %v444
    %510 = vmatprep.subr.bf16.mxu0 %v447
    %511 = vmatpush1.bf16.msra.mxu0 %v446
    %512 = vmatprep.subr.bf16.mxu0 %v449
    %513 = vmatpush1.bf16.msra.mxu0 %v448
    %514 = vmatprep.subr.bf16.mxu0 %v451
    %515 = vmatpush1.bf16.msra.mxu0 %v450
    %516 = vmatprep.subr.bf16.mxu0 %v453
    %517 = vmatpush1.bf16.msra.mxu0 %v452
    %518 = vmatprep.subr.bf16.mxu0 %v455
    %519 = vmatpush1.bf16.msra.mxu0 %v454
    %520 = vmatprep.subr.bf16.mxu0 %v457
    %521 = vmatpush1.bf16.msra.mxu0 %v456
    %522 = vmatprep.subr.bf16.mxu0 %v459
    %523 = vmatpush1.bf16.msra.mxu0 %v458
    %524 = vmatprep.mubr.bf16.mxu0 %v273
    %525 = vmatmul.mubr.bf16.gmra.mrb[0].mxu0 %v272
    %v526 = vpop.f32.mrb[0].mxu0
    %v527 = vadd.f32 %v325, %v526
    %v528 = vpop.f32.mrb[0].mxu0
    %v529 = vadd.f32 %v329, %v528
    %v530 = vpop.f32.mrb[0].mxu0
    %v531 = vadd.f32 %v325, %v530
    %v532 = vpop.f32.mrb[0].mxu0
    %v533 = vadd.f32 %v329, %v532
    %534 = vmatprep.mubr.bf16.mxu0 %v275
    %535 = vmatmul.mubr.bf16.gmra.mrb[0].mxu0 %v274
    %v536 = vpop.f32.mrb[0].mxu0
    %v537 = vadd.f32 %v325, %v536
    %v538 = vpop.f32.mrb[0].mxu0
    %v539 = vadd.f32 %v329, %v538
    %v540 = vpop.f32.mrb[0].mxu0
    %v541 = vadd.f32 %v325, %v540
    %v542 = vpop.f32.mrb[0].mxu0
    %v543 = vadd.f32 %v329, %v542
    %544 = vmatprep.mubr.bf16.mxu0 %v277
    %545 = vmatmul.mubr.bf16.gmra.mrb[0].mxu0 %v276
    %v546 = vpop.f32.mrb[0].mxu0
    %v547 = vadd.f32 %v325, %v546
    %v548 = vpop.f32.mrb[0].mxu0
    %v549 = vadd.f32 %v329, %v548
    %v550 = vpop.f32.mrb[0].mxu0
    %v551 = vadd.f32 %v325, %v550
    %v552 = vpop.f32.mrb[0].mxu0
    %v553 = vadd.f32 %v329, %v552
    %554 = vmatprep.mubr.bf16.mxu0 %v279
    %555 = vmatmul.mubr.bf16.gmra.mrb[0].mxu0 %v278
    %v556 = vpop.f32.mrb[0].mxu0
    %v557 = vadd.f32 %v325, %v556
    %v558 = vpop.f32.mrb[0].mxu0
    %v559 = vadd.f32 %v329, %v558
    %v560 = vpop.f32.mrb[0].mxu0
    %v561 = vadd.f32 %v325, %v560
    %v562 = vpop.f32.mrb[0].mxu0
    %v563 = vadd.f32 %v329, %v562
    %564 = vmatprep.mubr.bf16.mxu0 %v281
    %565 = vmatmul.mubr.bf16.gmra.mrb[0].mxu0 %v280
    %v566 = vpop.f32.mrb[0].mxu0
    %v567 = vadd.f32 %v325, %v566
    %v568 = vpop.f32.mrb[0].mxu0
    %v569 = vadd.f32 %v329, %v568
    %v570 = vpop.f32.mrb[0].mxu0
    %v571 = vadd.f32 %v325, %v570
    %v572 = vpop.f32.mrb[0].mxu0
    %v573 = vadd.f32 %v329, %v572
    %574 = vmatprep.mubr.bf16.mxu0 %v283
    %575 = vmatmul.mubr.bf16.gmra.mrb[0].mxu0 %v282
    %v576 = vpop.f32.mrb[0].mxu0
    %v577 = vadd.f32 %v325, %v576
    %v578 = vpop.f32.mrb[0].mxu0
    %v579 = vadd.f32 %v329, %v578
    %v580 = vpop.f32.mrb[0].mxu0
    %v581 = vadd.f32 %v325, %v580
    %v582 = vpop.f32.mrb[0].mxu0
    %v583 = vadd.f32 %v329, %v582
    %584 = vmatprep.mubr.bf16.mxu0 %v285
    %585 = vmatmul.mubr.bf16.gmra.mrb[0].mxu0 %v284
    %v586 = vpop.f32.mrb[0].mxu0
    %v587 = vadd.f32 %v325, %v586
    %v588 = vpop.f32.mrb[0].mxu0
    %v589 = vadd.f32 %v329, %v588
    %v590 = vpop.f32.mrb[0].mxu0
    %v591 = vadd.f32 %v325, %v590
    %v592 = vpop.f32.mrb[0].mxu0
    %v593 = vadd.f32 %v329, %v592
    %594 = vmatprep.mubr.bf16.mxu0 %v287
    %595 = vmatmul.mubr.bf16.gmra.mrb[0].mxu0 %v286
    %v596 = vpop.f32.mrb[0].mxu0
    %v597 = vadd.f32 %v325, %v596
    %v598 = vpop.f32.mrb[0].mxu0
    %v599 = vadd.f32 %v329, %v598
    %v600 = vpop.f32.mrb[0].mxu0
    %v601 = vadd.f32 %v325, %v600
    %v602 = vpop.f32.mrb[0].mxu0
    %v603 = vadd.f32 %v329, %v602
    %604 = vdwg.mxu0
    %v605 = vmax.f32 %v527, 0.0
    %v606 = vmax.f32 %v529, 0.0
    %v607 = vmax.f32 %v531, 0.0
    %v608 = vmax.f32 %v533, 0.0
    %v609 = vmax.f32 %v537, 0.0
    %v610 = vmax.f32 %v539, 0.0
    %v611 = vmax.f32 %v541, 0.0
    %v612 = vmax.f32 %v543, 0.0
    %v613 = vmax.f32 %v547, 0.0
    %v614 = vmax.f32 %v549, 0.0
    %v615 = vmax.f32 %v551, 0.0
    %v616 = vmax.f32 %v553, 0.0
    %v617 = vmax.f32 %v557, 0.0
    %v618 = vmax.f32 %v559, 0.0
    %v619 = vmax.f32 %v561, 0.0
    %v620 = vmax.f32 %v563, 0.0
    %v621 = vmax.f32 %v567, 0.0
    %v622 = vmax.f32 %v569, 0.0
    %v623 = vmax.f32 %v571, 0.0
    %v624 = vmax.f32 %v573, 0.0
    %v625 = vmax.f32 %v577, 0.0
    %v626 = vmax.f32 %v579, 0.0
    %v627 = vmax.f32 %v581, 0.0
    %v628 = vmax.f32 %v583, 0.0
    %v629 = vmax.f32 %v587, 0.0
    %v630 = vmax.f32 %v589, 0.0
    %v631 = vmax.f32 %v591, 0.0
    %v632 = vmax.f32 %v593, 0.0
    %v633 = vmax.f32 %v597, 0.0
    %v634 = vmax.f32 %v599, 0.0
    %v635 = vmax.f32 %v601, 0.0
    %v636 = vmax.f32 %v603, 0.0
    %v637 = vld [vmem:[%s5] sm:$0x3]
    %v638 = vpack.c.bf16 %v607, %v605
    %v639 = vpack.c.bf16 %v608, %v606
    %v640 = vpack.c.bf16 %v611, %v609
    %v641 = vpack.c.bf16 %v612, %v610
    %v642 = vpack.c.bf16 %v615, %v613
    %v643 = vpack.c.bf16 %v616, %v614
    %v644 = vpack.c.bf16 %v619, %v617
    %v645 = vpack.c.bf16 %v620, %v618
    %v646 = vpack.c.bf16 %v623, %v621
    %v647 = vpack.c.bf16 %v624, %v622
    %v648 = vpack.c.bf16 %v627, %v625
    %v649 = vpack.c.bf16 %v628, %v626
    %v650 = vpack.c.bf16 %v631, %v629
    %v651 = vpack.c.bf16 %v632, %v630
    %v652 = vpack.c.bf16 %v635, %v633
    %v653 = vpack.c.bf16 %v636, %v634
    %s654 = sld [smem:[#allocation2]]
    %v655 = vstv %s654
    %v658 = vunpack.c.l.s4 1966171168
    %v659 = vunpack.c.0.s8 %v658
    %v660 = vlaneseq
    %v661 = vshrl.u32 %v660, 7
    %v662 = vsub.s32 %v659, %v661
    %v663 = vrot.slane %v637, %v662
    %v664 = vcombine.high %v663, %v663
    %v666 = vunpack.c.l.s4 1966171168
    %v667 = vunpack.c.0.s8 %v666
    %v668 = vlaneseq
    %v669 = vshrl.u32 %v668, 7
    %v670 = vsub.s32 %v667, %v669
    %v671 = vrot.slane %v663, %v670
    %v673 = vunpack.c.l.s4 1966171168
    %v674 = vunpack.c.0.s8 %v673
    %v675 = vlaneseq
    %v676 = vshrl.u32 %v675, 7
    %v677 = vsub.s32 %v674, %v676
    %v678 = vrot.slane %v664, %v677
    %681 = vmatprep.subr.bf16.mxu0 %v639
    %682 = vmatpush1.bf16.xpose.msra.mxu0 %v638
    %683 = vmatprep.subr.bf16.mxu0 %v641
    %684 = vmatpush1.bf16.xpose.msra.mxu0 %v640
    %685 = vmatprep.subr.bf16.mxu0 %v643
    %686 = vmatpush1.bf16.xpose.msra.mxu0 %v642
    %687 = vmatprep.subr.bf16.mxu0 %v645
    %688 = vmatpush1.bf16.xpose.msra.mxu0 %v644
    %689 = vmatprep.subr.bf16.mxu0 %v647
    %690 = vmatpush1.bf16.xpose.msra.mxu0 %v646
    %691 = vmatprep.subr.bf16.mxu0 %v649
    %692 = vmatpush1.bf16.xpose.msra.mxu0 %v648
    %693 = vmatprep.subr.bf16.mxu0 %v651
    %694 = vmatpush1.bf16.xpose.msra.mxu0 %v650
    %695 = vmatprep.subr.bf16.mxu0 %v653
    %696 = vmatpush1.bf16.xpose.msra.mxu0 %v652
    %697 = vmatprep.subr.bf16.mxu0 0
    %698 = vmatpush1.bf16.xpose.msra.mxu0 0
    %699 = vmatprep.subr.bf16.mxu0 0
    %700 = vmatpush1.bf16.xpose.msra.mxu0 0
    %701 = vmatprep.subr.bf16.mxu0 0
    %702 = vmatpush1.bf16.xpose.msra.mxu0 0
    %703 = vmatprep.subr.bf16.mxu0 0
    %704 = vmatpush1.bf16.xpose.msra.mxu0 0
    %705 = vmatprep.subr.bf16.mxu0 0
    %706 = vmatpush1.bf16.xpose.msra.mxu0 0
    %707 = vmatprep.subr.bf16.mxu0 0
    %708 = vmatpush1.bf16.xpose.msra.mxu0 0
    %709 = vmatprep.subr.bf16.mxu0 0
    %710 = vmatpush1.bf16.xpose.msra.mxu0 0
    %711 = vmatprep.subr.bf16.mxu0 0
    %712 = vmatpush1.bf16.xpose.msra.mxu0 0
    %713 = vmatprep.mubr.bf16.mxu0 %v678
    %714 = vmatmul.mubr.bf16.gmra.mrb[0].mxu0 %v671
    %v715 = vpop.f32.mrb[0].mxu0
    %v716 = vadd.f32 %v655, %v715
    %v717 = vpop.f32.mrb[0].mxu0
    %v718 = vpop.f32.mrb[0].mxu0
    %v719 = vpop.f32.mrb[0].mxu0
    %720 = vdwg.mxu0
    %721 = vst [vmem:[%s7] sm:$0x1] %v716
    // Predicated region
    $region34: #{critic_forward.1} parent=1 // pred_check
      _
    $region35: #{critic_forward.1} parent=1 // pred_check_branch
      %723 = sbr.rel (0) target = $region37
    $region36: #{critic_forward.1} parent=1 // pred_region
      _
    $region37: #{critic_forward.1} parent=1 // pred_fallthru
      _
    // Predicated region
    $region38: #{critic_forward.1} parent=1 // pred_check
      _
    $region39: #{critic_forward.1} parent=1 // pred_check_branch
      %725 = sbr.rel (0) target = $region41
    $region40: #{critic_forward.1} parent=1 // pred_region
      _
    $region41: #{critic_forward.1} parent=1 // pred_fallthru
      _
    %726 = vsyncpa [#allocation4], 1

</llo_original>
